<compile_context>
chip_gen: v6e
topology: v6e:2x2x1
jax: 0.10.0
libtpu: 0.0.40
codegen_flags: <defaults>
</compile_context>

<pallas_src>
import functools

import jax
import jax.numpy as jnp
from jax import lax
from jax.experimental import pallas as pl
from jax.experimental.pallas import tpu as pltpu


# ---------------------------------------------------------------------------
# One-time pltpu.roll direction probe (cached).  Guarantees correct halo shifts
# regardless of the roll rotation convention; falls back to concat if roll is
# unavailable on this backend.
# ---------------------------------------------------------------------------
_ROLL_SIGN = None


def _probe_roll_sign():
    """+1 if pltpu.roll matches jnp.roll (elements move toward higher indices),
    -1 for the opposite rotation, 0 if roll is unusable (concat fallback)."""

    def _kernel(o_ref):
        x = lax.broadcasted_iota(jnp.int32, (2, 8, 128), 2).astype(jnp.float32)
        o_ref[...] = pltpu.roll(x, 1, axis=2)

    try:
        y = pl.pallas_call(
            _kernel, out_shape=jax.ShapeDtypeStruct((2, 8, 128), jnp.float32)
        )()
        v = float(jax.device_get(y)[0, 0, 1])
        if v == 0.0:
            return 1       # y[..., 1] == x[..., 0]  -> jnp.roll convention
        if v == 2.0:
            return -1      # y[..., 1] == x[..., 2]  -> reversed convention
    except Exception:
        pass
    return 0


def _get_roll_sign():
    global _ROLL_SIGN
    if _ROLL_SIGN is None:
        _ROLL_SIGN = _probe_roll_sign()
    return _ROLL_SIGN


# ---------------------------------------------------------------------------
# Kernel
# ---------------------------------------------------------------------------
def conv_block_kernel(x_ref, w1_ref, b1_ref, w2_ref, b2_ref, out_ref, *,
                      dot_dtype, precision, roll_sign):
    # x_ref:   (nb, C_in, L)    one batch block, PyTorch layout (no wrapper transpose)
    # w1_ref:  (C_mid, 3*C_in)  tap-stacked weights, taps [k=0 | k=1 | k=2] on contraction
    # b1_ref:  (C_mid, 1)
    # w2_ref:  (C_out, 3*C_mid)
    # b2_ref:  (C_out, 1)
    # out_ref: (nb, C_out, L)
    L = x_ref.shape[-1]

    # In-kernel edge masks (no HBM mask stream): zero the taps that would read
    # across the length-L sample boundary (Conv1d padding=1 semantics).
    lane = lax.broadcasted_iota(jnp.int32, (1, 1, L), 2)
    not_first = (lane != 0).astype(jnp.float32)       # x[l-1] tap valid
    not_last = (lane != L - 1).astype(jnp.float32)    # x[l+1] tap valid

    def shift(a, d):
        # a[..., l] -> a[..., l - d]; the wrapped lane is zeroed by the masks above.
        if roll_sign != 0:
            return pltpu.roll(a, (roll_sign * d) % L, axis=2)   # XLU, no slab copies
        # Fallback: zero-pad lane shift via concatenation.
        z = jnp.zeros_like(a[:, :, :1])
        if d == 1:
            return jnp.concatenate([z, a[:, :, :-1]], axis=2)
        return jnp.concatenate([a[:, :, 1:], z], axis=2)

    def conv3_relu(a, w_ref, b_ref):
        # a: (nb, C, L) f32.  One MXU matmul per layer: taps stacked on contraction.
        a_prev = shift(a, 1) * not_first
        a_next = shift(a, -1) * not_last
        a_cat = jnp.concatenate([a_prev, a, a_next], axis=1)      # (nb, 3*C, L)
        w = w_ref[...]                                            # (C_out, 3*C)
        lhs = jnp.broadcast_to(w[None], (a.shape[0],) + w.shape)  # (nb, C_out, 3*C)
        if dot_dtype is not None:
            lhs = lhs.astype(dot_dtype)
            a_cat = a_cat.astype(dot_dtype)
        acc = lax.dot_general(
            lhs, a_cat,
            dimension_numbers=(((2,), (1,)), ((0,), (0,))),       # batched (nb) matmul
            preferred_element_type=jnp.float32,
            precision=precision,
        )                                                         # (nb, C_out, L) f32
        # Bias as a (1, C_out, 1) broadcast; ReLU in f32 (v5e has no bf16 VPU).
        return jnp.maximum(acc + b_ref[...][None, :, :], 0.0)

    h = conv3_relu(x_ref[...].astype(jnp.float32), w1_ref, b1_ref)   # (nb, C_mid, L)
    y = conv3_relu(h, w2_ref, b2_ref)                                # (nb, C_out, L)
    out_ref[...] = y.astype(out_ref.dtype)


# ---------------------------------------------------------------------------
# Block sizing
# ---------------------------------------------------------------------------
def _vmem_capacity_bytes():
    try:
        return int(pltpu.get_tpu_info().vmem_capacity_bytes)
    except Exception:
        return 64 * 1024 * 1024   # conservative default: v7x per-core VMEM


def _pick_nb(N, C_in, C_mid, C_out, L, itemsize=4):
    """Samples per grid step: sized from chip VMEM and a live-intermediate budget,
    always a divisor of N, and leaving >= 2 grid steps whenever possible."""
    vmem = _vmem_capacity_bytes()
    # Double-buffered x/out DMA streams of one grid step.
    stream_per_sample = 2 * (C_in + C_out) * L * itemsize
    # Live intermediates of one step (x + its taps, h + its taps, y): kept small so
    # Mosaic doesn't spill the 64-vreg file back through the vld/vst slots.
    live_per_sample = (6 * C_in + 6 * C_mid + C_out) * L * itemsize
    max_nb = max(1, min((vmem // 8) // max(stream_per_sample, 1),
                        (4 * 1024 * 1024) // max(live_per_sample, 1)))
    if N >= 2:
        max_nb = min(max_nb, N // 2)   # >= 2 grid steps: v7x megacore + DMA pipelining
    max_nb = max(1, min(max_nb, N))
    nb = 1
    for d in range(1, max_nb + 1):
        if N % d == 0:
            nb = d
    return nb


# ---------------------------------------------------------------------------
# Wrapper
# ---------------------------------------------------------------------------
def conv_block(x, w1, b1, w2, b2, *, dot_dtype=None, nb=None):
    """x: (N, C_in, L).  w1: (C_mid, C_in, 3), b1: (C_mid,), w2: (C_out, C_mid, 3),
    b2: (C_out,).  Returns (N, C_out, L); matches the PyTorch ConvBlock forward.

    dot_dtype=jnp.bfloat16 casts only the MXU operands (recommended for v6e/v7x);
    the default (None) keeps f32 operands with precision=HIGHEST for exact parity.
    """
    N, C_in, L = x.shape
    C_mid = w1.shape[0]
    C_out = w2.shape[0]

    # Tap-stacked weights: (C_out, 3*C) with taps [k=0 | k=1 | k=2] along the
    # contraction axis, matching concat([a_prev, a, a_next], axis=1) in the kernel.
    w1_cat = jnp.concatenate([w1[:, :, 0], w1[:, :, 1], w1[:, :, 2]], axis=1)
    w2_cat = jnp.concatenate([w2[:, :, 0], w2[:, :, 1], w2[:, :, 2]], axis=1)
    if dot_dtype is not None:
        w1_cat = w1_cat.astype(dot_dtype)
        w2_cat = w2_cat.astype(dot_dtype)
    b1_c = b1.reshape(C_mid, 1).astype(jnp.float32)
    b2_c = b2.reshape(C_out, 1).astype(jnp.float32)

    if nb is None:
        nb = _pick_nb(N, C_in, C_mid, C_out, L)
    assert N % nb == 0
    grid = (N // nb,)

    precision = lax.Precision.HIGHEST if dot_dtype is None else None
    kernel = functools.partial(
        conv_block_kernel,
        dot_dtype=dot_dtype, precision=precision, roll_sign=_get_roll_sign())

    vmem_cap = _vmem_capacity_bytes()
    return pl.pallas_call(
        kernel,
        out_shape=jax.ShapeDtypeStruct((N, C_out, L), x.dtype),
        grid_spec=pltpu.PrefetchScalarGridSpec(
            num_scalar_prefetch=0,
            grid=grid,
            in_specs=[
                pl.BlockSpec((nb, C_in, L), lambda b: (b, 0, 0)),
                pl.BlockSpec((C_mid, 3 * C_in), lambda b: (0, 0)),
                pl.BlockSpec((C_mid, 1), lambda b: (0, 0)),
                pl.BlockSpec((C_out, 3 * C_mid), lambda b: (0, 0)),
                pl.BlockSpec((C_out, 1), lambda b: (0, 0)),
            ],
            out_specs=pl.BlockSpec((nb, C_out, L), lambda b: (b, 0, 0)),
        ),
        compiler_params=pltpu.CompilerParams(
            dimension_semantics=("parallel",),            # batch blocks shard across TCs (v7x)
            vmem_limit_bytes=int(vmem_cap * 3 // 4),      # chip-derived, under physical VMEM
        ),
    )(x, w1_cat, b1_c, w2_cat, b2_c)


# ---------------------------------------------------------------------------
# Pure-JAX reference (PyTorch Conv1d k=3, p=1, s=1 semantics)
# ---------------------------------------------------------------------------
def _conv1d_ref(x, w, b):
    L = x.shape[-1]
    xp = jnp.pad(x, ((0, 0), (0, 0), (1, 1)))
    out = jnp.broadcast_to(b[None, :, None], (x.shape[0], w.shape[0], L))
    for k in range(3):
        out = out + jnp.einsum("oi,nil->nol", w[:, :, k], xp[:, :, k:k + L])
    return out


def conv_block_ref(x, w1, b1, w2, b2):
    h = jnp.maximum(_conv1d_ref(x, w1, b1), 0.0)
    return jnp.maximum(_conv1d_ref(h, w2, b2), 0.0)


if __name__ == "__main__":
    # ConvBlock(in_channels=4, middle_channels=8, out_channels=4), batch=2, length=16
    N, C_in, C_mid, C_out, L = 2, 4, 8, 4, 16

    key = jax.random.PRNGKey(0)
    kx, kw1, kb1, kw2, kb2 = jax.random.split(key, 5)

    x = jax.random.normal(kx, (N, C_in, L), dtype=jnp.float32)
    w1 = jax.random.normal(kw1, (C_mid, C_in, 3), dtype=jnp.float32) * 0.2
    b1 = jax.random.normal(kb1, (C_mid,), dtype=jnp.float32) * 0.1
    w2 = jax.random.normal(kw2, (C_out, C_mid, 3), dtype=jnp.float32) * 0.2
    b2 = jax.random.normal(kb2, (C_out,), dtype=jnp.float32) * 0.1

    ref = conv_block_ref(x, w1, b1, w2, b2)

    # Exact-parity f32 path.
    out = jax.block_until_ready(conv_block(x, w1, b1, w2, b2))
    assert out.shape == (N, C_out, L)
    assert jnp.allclose(out, ref, atol=1e-4, rtol=1e-4), "f32 kernel mismatch vs reference"

    # bf16 MXU-operand path (the production default for v6e/v7x); looser tolerance.
    out_bf16 = jax.block_until_ready(
        conv_block(x, w1, b1, w2, b2, dot_dtype=jnp.bfloat16))
    assert jnp.allclose(out_bf16, ref, atol=1e-1, rtol=1e-1), "bf16-operand kernel mismatch"

    print("KERNEL_OK")
</pallas_src>

<mosaic_0001>
module attributes {stable_mosaic.version = 11 : i64} {
  func.func @conv_block_kernel(%arg0: i32, %arg1: memref<1x4x16xf32, #tpu.memory_space<vmem>>, %arg2: memref<8x12xf32, #tpu.memory_space<vmem>>, %arg3: memref<8x1xf32, #tpu.memory_space<vmem>>, %arg4: memref<4x24xf32, #tpu.memory_space<vmem>>, %arg5: memref<4x1xf32, #tpu.memory_space<vmem>>, %arg6: memref<1x4x16xf32, #tpu.memory_space<vmem>>) attributes {dimension_semantics = [#tpu.dimension_semantics<parallel>], iteration_bounds = array<i64: 2>, scalar_prefetch = 0 : i64, scratch_operands = 0 : i64, tpu.core_type = #tpu.core_type<tc>, window_params = [{transform_indices = @transform_0, window_bounds = array<i64: 1, 4, 16>}, {pipeline_mode = #tpu.pipeline_mode<synchronous>, transform_indices = @transform_1, window_bounds = array<i64: 8, 12>}, {pipeline_mode = #tpu.pipeline_mode<synchronous>, transform_indices = @transform_2, window_bounds = array<i64: 8, 1>}, {pipeline_mode = #tpu.pipeline_mode<synchronous>, transform_indices = @transform_3, window_bounds = array<i64: 4, 24>}, {pipeline_mode = #tpu.pipeline_mode<synchronous>, transform_indices = @transform_4, window_bounds = array<i64: 4, 1>}, {transform_indices = @transform_5, window_bounds = array<i64: 1, 4, 16>}]} {
    %0 = tpu.iota {dimensions = array<i32: 2>} : vector<1x1x16xi32>
    %c0_i32 = arith.constant 0 : i32
    %1 = vector.broadcast %c0_i32 : i32 to vector<1x1x16xi32>
    %2 = arith.cmpi ne, %0, %1 : vector<1x1x16xi32>
    %3 = arith.extui %2 : vector<1x1x16xi1> to vector<1x1x16xi32>
    %4 = arith.sitofp %3 : vector<1x1x16xi32> to vector<1x1x16xf32>
    %c15_i32 = arith.constant 15 : i32
    %5 = vector.broadcast %c15_i32 : i32 to vector<1x1x16xi32>
    %6 = arith.cmpi ne, %0, %5 : vector<1x1x16xi32>
    %7 = arith.extui %6 : vector<1x1x16xi1> to vector<1x1x16xi32>
    %8 = arith.sitofp %7 : vector<1x1x16xi32> to vector<1x1x16xf32>
    %c0 = arith.constant 0 : index
    %c0_0 = arith.constant 0 : index
    %c0_1 = arith.constant 0 : index
    %9 = vector.load %arg1[%c0, %c0_0, %c0_1] : memref<1x4x16xf32, #tpu.memory_space<vmem>>, vector<1x4x16xf32>
    %cst = arith.constant 0.000000e+00 : f32
    %10 = vector.broadcast %cst : f32 to vector<1x4x1xf32>
    %11 = vector.extract_strided_slice %9 {offsets = [0, 0, 0], sizes = [1, 4, 15], strides = [1, 1, 1]} : vector<1x4x16xf32> to vector<1x4x15xf32>
    %12 = tpu.concatenate %10, %11 in 2 : vector<1x4x1xf32>, vector<1x4x15xf32> -> vector<1x4x16xf32>
    %13 = vector.broadcast %4 : vector<1x1x16xf32> to vector<1x4x16xf32>
    %14 = arith.mulf %12, %13 : vector<1x4x16xf32>
    %cst_2 = arith.constant 0.000000e+00 : f32
    %15 = vector.broadcast %cst_2 : f32 to vector<1x4x1xf32>
    %16 = vector.extract_strided_slice %9 {offsets = [0, 0, 1], sizes = [1, 4, 15], strides = [1, 1, 1]} : vector<1x4x16xf32> to vector<1x4x15xf32>
    %17 = tpu.concatenate %16, %15 in 2 : vector<1x4x15xf32>, vector<1x4x1xf32> -> vector<1x4x16xf32>
    %18 = vector.broadcast %8 : vector<1x1x16xf32> to vector<1x4x16xf32>
    %19 = arith.mulf %17, %18 : vector<1x4x16xf32>
    %20 = tpu.concatenate %14, %9, %19 in 1 : vector<1x4x16xf32>, vector<1x4x16xf32>, vector<1x4x16xf32> -> vector<1x12x16xf32>
    %c0_3 = arith.constant 0 : index
    %c0_4 = arith.constant 0 : index
    %21 = vector.load %arg2[%c0_3, %c0_4] : memref<8x12xf32, #tpu.memory_space<vmem>>, vector<8x12xf32>
    %22 = vector.shape_cast %21 : vector<8x12xf32> to vector<1x8x12xf32>
    %cst_5 = arith.constant dense<0.000000e+00> : vector<1x8x16xf32>
    %23 = tpu.matmul %22, %20, %cst_5 {dimension_numbers = #tpu.dot_dimension_numbers<[2], [1], [1], [2], [0, 0, 0, 1, 1, 2], [0], [0]>, precision = #tpu.contract_precision<fp32>} : vector<1x8x12xf32>, vector<1x12x16xf32>, vector<1x8x16xf32> -> vector<1x8x16xf32>
    %c0_6 = arith.constant 0 : index
    %c0_7 = arith.constant 0 : index
    %24 = vector.load %arg3[%c0_6, %c0_7] : memref<8x1xf32, #tpu.memory_space<vmem>>, vector<8x1xf32>
    %25 = vector.shape_cast %24 : vector<8x1xf32> to vector<1x8x1xf32>
    %26 = vector.broadcast %25 : vector<1x8x1xf32> to vector<1x8x16xf32>
    %27 = arith.addf %23, %26 : vector<1x8x16xf32>
    %cst_8 = arith.constant 0.000000e+00 : f32
    %28 = vector.broadcast %cst_8 : f32 to vector<1x8x16xf32>
    %29 = arith.maximumf %27, %28 : vector<1x8x16xf32>
    %cst_9 = arith.constant 0.000000e+00 : f32
    %30 = vector.broadcast %cst_9 : f32 to vector<1x8x1xf32>
    %31 = vector.extract_strided_slice %29 {offsets = [0, 0, 0], sizes = [1, 8, 15], strides = [1, 1, 1]} : vector<1x8x16xf32> to vector<1x8x15xf32>
    %32 = tpu.concatenate %30, %31 in 2 : vector<1x8x1xf32>, vector<1x8x15xf32> -> vector<1x8x16xf32>
    %33 = vector.broadcast %4 : vector<1x1x16xf32> to vector<1x8x16xf32>
    %34 = arith.mulf %32, %33 : vector<1x8x16xf32>
    %cst_10 = arith.constant 0.000000e+00 : f32
    %35 = vector.broadcast %cst_10 : f32 to vector<1x8x1xf32>
    %36 = vector.extract_strided_slice %29 {offsets = [0, 0, 1], sizes = [1, 8, 15], strides = [1, 1, 1]} : vector<1x8x16xf32> to vector<1x8x15xf32>
    %37 = tpu.concatenate %36, %35 in 2 : vector<1x8x15xf32>, vector<1x8x1xf32> -> vector<1x8x16xf32>
    %38 = vector.broadcast %8 : vector<1x1x16xf32> to vector<1x8x16xf32>
    %39 = arith.mulf %37, %38 : vector<1x8x16xf32>
    %40 = tpu.concatenate %34, %29, %39 in 1 : vector<1x8x16xf32>, vector<1x8x16xf32>, vector<1x8x16xf32> -> vector<1x24x16xf32>
    %c0_11 = arith.constant 0 : index
    %c0_12 = arith.constant 0 : index
    %41 = vector.load %arg4[%c0_11, %c0_12] : memref<4x24xf32, #tpu.memory_space<vmem>>, vector<4x24xf32>
    %42 = vector.shape_cast %41 : vector<4x24xf32> to vector<1x4x24xf32>
    %cst_13 = arith.constant dense<0.000000e+00> : vector<1x4x16xf32>
    %43 = tpu.matmul %42, %40, %cst_13 {dimension_numbers = #tpu.dot_dimension_numbers<[2], [1], [1], [2], [0, 0, 0, 1, 1, 2], [0], [0]>, precision = #tpu.contract_precision<fp32>} : vector<1x4x24xf32>, vector<1x24x16xf32>, vector<1x4x16xf32> -> vector<1x4x16xf32>
    %c0_14 = arith.constant 0 : index
    %c0_15 = arith.constant 0 : index
    %44 = vector.load %arg5[%c0_14, %c0_15] : memref<4x1xf32, #tpu.memory_space<vmem>>, vector<4x1xf32>
    %45 = vector.shape_cast %44 : vector<4x1xf32> to vector<1x4x1xf32>
    %46 = vector.broadcast %45 : vector<1x4x1xf32> to vector<1x4x16xf32>
    %47 = arith.addf %43, %46 : vector<1x4x16xf32>
    %cst_16 = arith.constant 0.000000e+00 : f32
    %48 = vector.broadcast %cst_16 : f32 to vector<1x4x16xf32>
    %49 = arith.maximumf %47, %48 : vector<1x4x16xf32>
    %c0_17 = arith.constant 0 : index
    %c0_18 = arith.constant 0 : index
    %c0_19 = arith.constant 0 : index
    %50 = vector.load %arg6[%c0_17, %c0_18, %c0_19] : memref<1x4x16xf32, #tpu.memory_space<vmem>>, vector<1x4x16xf32>
    tpu.vector_store %arg6[%c0_17, %c0_18, %c0_19], %49 {strides = array<i32>} : memref<1x4x16xf32, #tpu.memory_space<vmem>>, vector<1x4x16xf32>,
    return
  }
  func.func @transform_0(%arg0: i32) -> (i32, i32, i32) {
    %c0_i32 = arith.constant 0 : i32
    %c0_i32_0 = arith.constant 0 : i32
    %c0_i32_1 = arith.constant 0 : i32
    return %arg0, %c0_i32, %c0_i32_0 : i32, i32, i32
  }
  func.func @transform_1(%arg0: i32) -> (i32, i32) {
    %c0_i32 = arith.constant 0 : i32
    %c0_i32_0 = arith.constant 0 : i32
    %c0_i32_1 = arith.constant 0 : i32
    return %c0_i32, %c0_i32_0 : i32, i32
  }
  func.func @transform_2(%arg0: i32) -> (i32, i32) {
    %c0_i32 = arith.constant 0 : i32
    %c0_i32_0 = arith.constant 0 : i32
    %c0_i32_1 = arith.constant 0 : i32
    return %c0_i32, %c0_i32_0 : i32, i32
  }
  func.func @transform_3(%arg0: i32) -> (i32, i32) {
    %c0_i32 = arith.constant 0 : i32
    %c0_i32_0 = arith.constant 0 : i32
    %c0_i32_1 = arith.constant 0 : i32
    return %c0_i32, %c0_i32_0 : i32, i32
  }
  func.func @transform_4(%arg0: i32) -> (i32, i32) {
    %c0_i32 = arith.constant 0 : i32
    %c0_i32_0 = arith.constant 0 : i32
    %c0_i32_1 = arith.constant 0 : i32
    return %c0_i32, %c0_i32_0 : i32, i32
  }
  func.func @transform_5(%arg0: i32) -> (i32, i32, i32) {
    %c0_i32 = arith.constant 0 : i32
    %c0_i32_0 = arith.constant 0 : i32
    %c0_i32_1 = arith.constant 0 : i32
    return %arg0, %c0_i32, %c0_i32_0 : i32, i32, i32
  }
}

</mosaic_0001>

<llo_original>
// kernel: tpu_custom_call.1
$region0: #{tpu_custom_call.1}
  #allocation0 [shape = 'u32[]', space=smem, size = 0x4, offset = 0x4, fixed_abs, tag = 'smem constant byte address 0x4 - core index']
  #allocation1 [shape = 'u32[144,128]{1,0:T(1,128)}', space=vmem, size = 0x12000, scoped, tag = 'internal scratch']
  %s0 = inlined_call_operand.vmem [shape: f32[2,4,16], index: 0, kind: input, shape index: {}]
  %s1 = inlined_call_operand.hbm [shape: f32[8,12], index: 1, kind: input, shape index: {}]
  %s2 = inlined_call_operand.vmem [shape: f32[8,1], index: 2, kind: input, shape index: {}]
  %s3 = inlined_call_operand.vmem [shape: f32[4,24], index: 3, kind: input, shape index: {}]
  %s4 = inlined_call_operand.vmem [shape: f32[4,1], index: 4, kind: input, shape index: {}]
  %s5 = inlined_call_operand.hbm [shape: f32[2,4,16], index: 5, kind: output, shape index: {}]
  %s6 = sld [smem:[#allocation0]]
  $region57: #{tpu_custom_call.1} parent=0
    _
  %s8 = ssub.s32 1, %s6
  %s9 = scalar_select 0, %s8, %s6
  $region1: #{tpu_custom_call.1} parent=0
    #allocation2 [shape = 'u8[4096]{0}', space=vmem, size = 0x1000, scoped, tag = 'input window, operand 1, single buffered']
    #allocation3 [shape = 's32[2]{0}', space=sflag, size = 0x8, scoped, tag = 'scoped memory for tpu_custom_call.1']
    #allocation4 [shape = 's32[2]{0}', space=sflag, size = 0x8, scoped, tag = 'scoped memory for tpu_custom_call.1']
    #allocation5 [shape = 'u8[4096]{0}', space=vmem, size = 0x1000, scoped, tag = 'output window, operand 0']
    %10 = vsyncpa [#allocation3], 0
    %11 = vsyncpa [#allocation4], 0
    %s12 = scalar_lea.sflag [#allocation4], 1
    %13 = vsyncpa %s12, 0
    loop: start=0, step=1, limit=4
    $region2: #{tpu_custom_call.1} parent=1 // loop_pre_header
      _
    $region3: #{tpu_custom_call.1} parent=1 // loop_header
      %s15 = sphi 0, %s19
      %p16 = scmp.ge.s32.totalorder %s15, 4
      %s25 = sphi 0, %s27
      %s28 = sphi 0, %s25
      %s29 = sphi 0, %s28
      %s45 = sphi 0, %s29
      %s49 = sphi 0, %s49
      %s51 = sphi 0, %s49
      %s52 = sphi 0, %s51
      %s66 = sphi 0, %s52
      %s70 = sphi 0, %s70
      %s72 = sphi 0, %s70
      %s73 = sphi 0, %s72
      %s87 = sphi 0, %s73
      %s91 = sphi 0, %s91
      %s93 = sphi 0, %s91
      %s94 = sphi 0, %s93
      %s108 = sphi 0, %s94
      %s112 = sphi 0, %s112
      %s114 = sphi 0, %s112
      %s115 = sphi 0, %s114
      %s129 = sphi 0, %s115
      %s135 = sphi 0, %s137
      %s138 = sphi 0, %s135
      %s139 = sphi 0, %s138
      %s155 = sphi 0, %s139
    $region4: #{tpu_custom_call.1} parent=1 // loop_header_branch
      %18 = sbr.rel (%p16) target = $region8
    $region5: #{tpu_custom_call.1} parent=1 // loop_body
      %s20 = ssub.s32 %s15, 1
      %s21 = ssub.s32 %s15, 2
      %s22 = sadd.s32 %s15, 1
      %s23 = ssub.s32 %s15, %s22
      %p24 = scmp.eq.s32.totalorder %s23, 0
      %s26 = sadd.s32 %s25, 1
      %s27 = scalar_select %p24, %s25, %s26
      %p30 = pneg %p24
      %p31 = scmp.eq.s32.totalorder %s15, 1
      %p32 = por %p30, %p31
      %p33 = scmp.ne.s32.totalorder %s25, %s28
      %p34 = scmp.eq.s32.totalorder %s15, 0
      %p35 = por %p33, %p34
      %p36 = scmp.ne.s32.totalorder %s25, %s28
      %p37 = scmp.eq.s32.totalorder %s20, 1
      %p38 = por %p36, %p37
      %p39 = scmp.ne.s32.totalorder %s28, %s29
      %p40 = scmp.eq.s32.totalorder %s20, 0
      %p41 = por %p39, %p40
      %p42 = scmp.ne.s32.totalorder %s28, %s29
      %p43 = scmp.eq.s32.totalorder %s21, 1
      %p44 = por %p42, %p43
      %p46 = scmp.ne.s32.totalorder %s29, %s45
      %p47 = scmp.eq.s32.totalorder %s21, 0
      %p48 = por %p46, %p47
      %s50 = sadd.s32 %s49, 1
      %p53 = scmp.eq.s32.totalorder %s15, 1
      %p54 = scmp.ne.s32.totalorder %s49, %s51
      %p55 = scmp.eq.s32.totalorder %s15, 0
      %p56 = por %p54, %p55
      %p57 = scmp.ne.s32.totalorder %s49, %s51
      %p58 = scmp.eq.s32.totalorder %s20, 1
      %p59 = por %p57, %p58
      %p60 = scmp.ne.s32.totalorder %s51, %s52
      %p61 = scmp.eq.s32.totalorder %s20, 0
      %p62 = por %p60, %p61
      %p63 = scmp.ne.s32.totalorder %s51, %s52
      %p64 = scmp.eq.s32.totalorder %s21, 1
      %p65 = por %p63, %p64
      %p67 = scmp.ne.s32.totalorder %s52, %s66
      %p68 = scmp.eq.s32.totalorder %s21, 0
      %p69 = por %p67, %p68
      %s71 = sadd.s32 %s70, 1
      %p74 = scmp.eq.s32.totalorder %s15, 1
      %p75 = scmp.ne.s32.totalorder %s70, %s72
      %p76 = scmp.eq.s32.totalorder %s15, 0
      %p77 = por %p75, %p76
      %p78 = scmp.ne.s32.totalorder %s70, %s72
      %p79 = scmp.eq.s32.totalorder %s20, 1
      %p80 = por %p78, %p79
      %p81 = scmp.ne.s32.totalorder %s72, %s73
      %p82 = scmp.eq.s32.totalorder %s20, 0
      %p83 = por %p81, %p82
      %p84 = scmp.ne.s32.totalorder %s72, %s73
      %p85 = scmp.eq.s32.totalorder %s21, 1
      %p86 = por %p84, %p85
      %p88 = scmp.ne.s32.totalorder %s73, %s87
      %p89 = scmp.eq.s32.totalorder %s21, 0
      %p90 = por %p88, %p89
      %s92 = sadd.s32 %s91, 1
      %p95 = scmp.eq.s32.totalorder %s15, 1
      %p96 = scmp.ne.s32.totalorder %s91, %s93
      %p97 = scmp.eq.s32.totalorder %s15, 0
      %p98 = por %p96, %p97
      %p99 = scmp.ne.s32.totalorder %s91, %s93
      %p100 = scmp.eq.s32.totalorder %s20, 1
      %p101 = por %p99, %p100
      %p102 = scmp.ne.s32.totalorder %s93, %s94
      %p103 = scmp.eq.s32.totalorder %s20, 0
      %p104 = por %p102, %p103
      %p105 = scmp.ne.s32.totalorder %s93, %s94
      %p106 = scmp.eq.s32.totalorder %s21, 1
      %p107 = por %p105, %p106
      %p109 = scmp.ne.s32.totalorder %s94, %s108
      %p110 = scmp.eq.s32.totalorder %s21, 0
      %p111 = por %p109, %p110
      %s113 = sadd.s32 %s112, 1
      %p116 = scmp.eq.s32.totalorder %s15, 1
      %p117 = scmp.ne.s32.totalorder %s112, %s114
      %p118 = scmp.eq.s32.totalorder %s15, 0
      %p119 = por %p117, %p118
      %p120 = scmp.ne.s32.totalorder %s112, %s114
      %p121 = scmp.eq.s32.totalorder %s20, 1
      %p122 = por %p120, %p121
      %p123 = scmp.ne.s32.totalorder %s114, %s115
      %p124 = scmp.eq.s32.totalorder %s20, 0
      %p125 = por %p123, %p124
      %p126 = scmp.ne.s32.totalorder %s114, %s115
      %p127 = scmp.eq.s32.totalorder %s21, 1
      %p128 = por %p126, %p127
      %p130 = scmp.ne.s32.totalorder %s115, %s129
      %p131 = scmp.eq.s32.totalorder %s21, 0
      %p132 = por %p130, %p131
      %s133 = ssub.s32 %s15, %s22
      %p134 = scmp.eq.s32.totalorder %s133, 0
      %s136 = sadd.s32 %s135, 1
      %s137 = scalar_select %p134, %s135, %s136
      %p140 = pneg %p134
      %p141 = scmp.eq.s32.totalorder %s15, 1
      %p142 = por %p140, %p141
      %p143 = scmp.ne.s32.totalorder %s135, %s138
      %p144 = scmp.eq.s32.totalorder %s15, 0
      %p145 = por %p143, %p144
      %p146 = scmp.ne.s32.totalorder %s135, %s138
      %p147 = scmp.eq.s32.totalorder %s20, 1
      %p148 = por %p146, %p147
      %p149 = scmp.ne.s32.totalorder %s138, %s139
      %p150 = scmp.eq.s32.totalorder %s20, 0
      %p151 = por %p149, %p150
      %p152 = scmp.ne.s32.totalorder %s138, %s139
      %p153 = scmp.eq.s32.totalorder %s21, 1
      %p154 = por %p152, %p153
      %p156 = scmp.ne.s32.totalorder %s139, %s155
      %p157 = scmp.eq.s32.totalorder %s21, 0
      %p158 = por %p156, %p157
      %p159 = scmp.le.s32.totalorder 1, %s15
      %p160 = scmp.lt.s32.totalorder %s15, 3
      %p161 = pnand %p159, %p160
      %p162 = pneg %p161
      // Predicated region
      $region9: #{tpu_custom_call.1} parent=5 // pred_check
        _
      $region10: #{tpu_custom_call.1} parent=5 // pred_check_branch
        %164 = sbr.rel (%p161) target = $region12
      $region11: #{tpu_custom_call.1} parent=5 // pred_region
        %s165 = ssub.s32 %s15, 1
        // Predicated region
        $region13: #{tpu_custom_call.1} parent=11 // pred_check
          %p166 = pneg %p62
        $region14: #{tpu_custom_call.1} parent=11 // pred_check_branch
          %168 = sbr.rel (%p166) target = $region16
        $region15: #{tpu_custom_call.1} parent=11 // pred_region
          %s170 = ssub.s32 128, 128
          %171 = vsyncadd [#allocation3], %s170
          %s173 = sshll.u32 [#allocation2], 4
          %s174 = int_to_ptr.vmem [resolvable:$true] %s173
          %176 = dma.hbm_to_vmem [thread:$0]  %s1, 128, %s174, [#allocation3]
        $region16: #{tpu_custom_call.1} parent=11 // pred_fallthru
          _
        // Predicated region
        $region17: #{tpu_custom_call.1} parent=11 // pred_check
          %p177 = pneg %p83
        $region18: #{tpu_custom_call.1} parent=11 // pred_check_branch
          %179 = sbr.rel (%p177) target = $region20
        $region19: #{tpu_custom_call.1} parent=11 // pred_region
          _
        $region20: #{tpu_custom_call.1} parent=11 // pred_fallthru
          _
        // Predicated region
        $region21: #{tpu_custom_call.1} parent=11 // pred_check
          %p180 = pneg %p104
        $region22: #{tpu_custom_call.1} parent=11 // pred_check_branch
          %182 = sbr.rel (%p180) target = $region24
        $region23: #{tpu_custom_call.1} parent=11 // pred_region
          _
        $region24: #{tpu_custom_call.1} parent=11 // pred_fallthru
          _
        // Predicated region
        $region25: #{tpu_custom_call.1} parent=11 // pred_check
          %p183 = pneg %p125
        $region26: #{tpu_custom_call.1} parent=11 // pred_check_branch
          %185 = sbr.rel (%p183) target = $region28
        $region27: #{tpu_custom_call.1} parent=11 // pred_region
          _
        $region28: #{tpu_custom_call.1} parent=11 // pred_fallthru
          _
      $region12: #{tpu_custom_call.1} parent=5 // pred_fallthru
        _
      %p186 = scmp.lt.s32.totalorder %s15, 2
      // Predicated region
      $region29: #{tpu_custom_call.1} parent=5 // pred_check
        %p187 = pneg %p186
      $region30: #{tpu_custom_call.1} parent=5 // pred_check_branch
        %189 = sbr.rel (%p187) target = $region32
      $region31: #{tpu_custom_call.1} parent=5 // pred_region
        // Predicated region
        $region33: #{tpu_custom_call.1} parent=31 // pred_check
          %p190 = pneg %p35
        $region34: #{tpu_custom_call.1} parent=31 // pred_check_branch
          %192 = sbr.rel (%p190) target = $region36
        $region35: #{tpu_custom_call.1} parent=31 // pred_region
          %p193 = scmp.lt.s32.totalorder %s15, 1
          %s194 = scalar_select %p193, %s15, 1
          %s195 = smul.addr %s194, 4
          %s196 = scalar_lea.vmem %s0, %s195
        $region36: #{tpu_custom_call.1} parent=31 // pred_fallthru
          _
      $region32: #{tpu_custom_call.1} parent=5 // pred_fallthru
        _
      %p197 = scmp.le.s32.totalorder 1, %s15
      %p198 = scmp.lt.s32.totalorder %s15, 3
      %p199 = pnand %p197, %p198
      %p200 = pneg %p199
      // Predicated region
      $region37: #{tpu_custom_call.1} parent=5 // pred_check
        _
      $region38: #{tpu_custom_call.1} parent=5 // pred_check_branch
        %202 = sbr.rel (%p199) target = $region40
      $region39: #{tpu_custom_call.1} parent=5 // pred_region
        %s203 = ssub.s32 %s15, 1
        // Predicated region
        $region41: #{tpu_custom_call.1} parent=39 // pred_check
          %p204 = pneg %p62
        $region42: #{tpu_custom_call.1} parent=39 // pred_check_branch
          %206 = sbr.rel (%p204) target = $region44
        $region43: #{tpu_custom_call.1} parent=39 // pred_region
          %207 = dma.done [#allocation3], 128
        $region44: #{tpu_custom_call.1} parent=39 // pred_fallthru
          _
        %p208 = scmp.lt.s32.totalorder %s20, 1
        %s209 = scalar_select %p208, %s20, 1
        %s210 = smul.addr %s209, 4
        %s211 = scalar_lea.vmem %s0, %s210
        %p212 = pneg %p41
        %p213 = pneg %p38
        %p214 = pneg %p62
        %p215 = pneg %p59
        %p216 = pneg %p83
        %p217 = pneg %p80
        %p218 = pneg %p104
        %p219 = pneg %p101
        %p220 = pneg %p125
        %p221 = pneg %p122
        %p222 = pneg %p151
        %p223 = pneg %p148
        %s224 = sand.u32 %s138, 1
        %s225 = scalar_lea.sflag [#allocation4], %s224
        %s226 = sand.u32 %s138, 1
        %s227 = smul.addr %s226, 4
        %s228 = scalar_lea.vmem [#allocation5], %s227
        %p229 = scmp.lt.s32.totalorder %s20, 1
        %s230 = scalar_select %p229, %s20, 1
        %s231 = smul.addr %s230, 4
        %s232 = scalar_lea.vmem %s0, %s231
        %v233 = vlaneseq
        %v234 = vand.u32 %v233, 127
        %vm235 = vcmp.ne.s32.totalorder %v234, 0
        %v236 = vsel %vm235, 1, 0
        %v237 = vcvt.s32.f32 %v236
        %vm238 = vcmp.ne.s32.totalorder %v234, 15
        %v239 = vsel %vm238, 1, 0
        %v240 = vcvt.s32.f32 %v239
        %v241 = vld [vmem:[%s232] sm:$0xf]
        %243 = vrot.lane.b32.xlu0 %v241, 1
        %v244 = vpop.permute.xlu0 %243
        %vm246 = vcmask 7168
        %v247 = vsel %vm246, 0.0, %v244
        %v248 = vmul.f32 %v247, %v237
        %249 = vrot.lane.b32.xlu0 %v241, 127
        %v250 = vpop.permute.xlu0 %249
        %vm252 = vcmask 121856
        %v253 = vsel %vm252, %v250, 0.0
        %v254 = vmul.f32 %v253, %v240
        %v255 = vrot.slane %v241, 4
        %vm257 = vcmask 1043456
        %v258 = vsel %vm257, %v248, %v255
        %v259 = vld [vmem:[#allocation2] sm:$0xff]
        %v260 = vld [vmem:[%s2] sm:$0xff]
        %262 = vset.pattern.permute.xlu0 0
        %263 = vperm.xlu0 %262, %v260
        %v264 = vpop.permute.xlu0 %263
        %vm266 = vcmask 97280
        %v268 = vsel %vm266, %v259, 0
        %v271 = vsel %vm257, %v254, 0
        %273 = vmatprep.subr.mxu0 0.0
        %274 = vmatpush1.msra.mxu0 0.0
        %275 = vmatprep.subr.mxu0 0.0
        %276 = vmatpush1.msra.mxu0 0.0
        %277 = vmatprep.subr.mxu0 0.0
        %278 = vmatpush1.msra.mxu0 0.0
        %279 = vmatprep.subr.mxu0 0.0
        %280 = vmatpush1.msra.mxu0 0.0
        %281 = vmatprep.subr.mxu0 0.0
        %282 = vmatpush1.msra.mxu0 0.0
        %283 = vmatprep.subr.mxu0 0.0
        %284 = vmatpush1.msra.mxu0 0.0
        %285 = vmatprep.subr.mxu0 0.0
        %286 = vmatpush1.msra.mxu0 0.0
        %287 = vmatprep.subr.mxu0 0.0
        %288 = vmatpush1.msra.mxu0 0.0
        %289 = vmatprep.subr.mxu0 0.0
        %290 = vmatpush1.msra.mxu0 0.0
        %291 = vmatprep.subr.mxu0 0.0
        %292 = vmatpush1.msra.mxu0 0.0
        %293 = vmatprep.subr.mxu0 0.0
        %294 = vmatpush1.msra.mxu0 0.0
        %295 = vmatprep.subr.mxu0 0.0
        %296 = vmatpush1.msra.mxu0 0.0
        %297 = vmatprep.subr.mxu0 0.0
        %298 = vmatpush1.msra.mxu0 0.0
        %299 = vmatprep.subr.mxu0 0.0
        %300 = vmatpush1.msra.mxu0 0.0
        %301 = vmatprep.subr.mxu0 0.0
        %v302 = vand.u32 %v271, 4294901760
        %303 = vmatpush1.msra.mxu0 %v302
        %304 = vmatprep.subr.mxu0 0.0
        %v305 = vand.u32 %v258, 4294901760
        %306 = vmatpush1.msra.mxu0 %v305
        %307 = vmatprep.subr.mxu0 0.0
        %308 = vmatpush2.msra.mxu0 0.0
        %309 = vmatprep.subr.mxu0 0.0
        %310 = vmatpush2.msra.mxu0 0.0
        %311 = vmatprep.subr.mxu0 0.0
        %312 = vmatpush2.msra.mxu0 0.0
        %313 = vmatprep.subr.mxu0 0.0
        %314 = vmatpush2.msra.mxu0 0.0
        %315 = vmatprep.subr.mxu0 0.0
        %316 = vmatpush2.msra.mxu0 0.0
        %317 = vmatprep.subr.mxu0 0.0
        %318 = vmatpush2.msra.mxu0 0.0
        %319 = vmatprep.subr.mxu0 0.0
        %320 = vmatpush2.msra.mxu0 0.0
        %321 = vmatprep.subr.mxu0 0.0
        %322 = vmatpush2.msra.mxu0 0.0
        %323 = vmatprep.subr.mxu0 0.0
        %324 = vmatpush2.msra.mxu0 0.0
        %325 = vmatprep.subr.mxu0 0.0
        %326 = vmatpush2.msra.mxu0 0.0
        %327 = vmatprep.subr.mxu0 0.0
        %328 = vmatpush2.msra.mxu0 0.0
        %329 = vmatprep.subr.mxu0 0.0
        %330 = vmatpush2.msra.mxu0 0.0
        %331 = vmatprep.subr.mxu0 0.0
        %332 = vmatpush2.msra.mxu0 0.0
        %333 = vmatprep.subr.mxu0 0.0
        %334 = vmatpush2.msra.mxu0 0.0
        %335 = vmatprep.subr.mxu0 0.0
        %336 = vmatpush2.msra.mxu0 0.0
        %337 = vmatprep.subr.mxu0 0.0
        %338 = vmatpush2.msra.mxu0 0.0
        %339 = vmatprep.mubr.f32.mxu0 0.0
        %v340 = vand.u32 %v268, 4294901760
        %v341 = vsub.f32 %v268, %v340
        %v342 = vand.u32 %v341, 4294901760
        %v343 = vsub.f32 %v341, %v342
        %v344 = vand.u32 %v343, 4294901760
        %345 = vmatmul.mubr.f32.gmra.mxu0 %v344
        %v346 = vpop.f32.mrf.mxu0
        %v347 = vadd.f32 %v264, %v346
        %v348 = vpop.f32.mrf.mxu0
        %349 = vdwg.mxu0
        %350 = vmatprep.subr.mxu0 0.0
        %351 = vmatpush1.msra.mxu0 0.0
        %352 = vmatprep.subr.mxu0 0.0
        %353 = vmatpush1.msra.mxu0 0.0
        %354 = vmatprep.subr.mxu0 0.0
        %355 = vmatpush1.msra.mxu0 0.0
        %356 = vmatprep.subr.mxu0 0.0
        %357 = vmatpush1.msra.mxu0 0.0
        %358 = vmatprep.subr.mxu0 0.0
        %359 = vmatpush1.msra.mxu0 0.0
        %360 = vmatprep.subr.mxu0 0.0
        %361 = vmatpush1.msra.mxu0 0.0
        %362 = vmatprep.subr.mxu0 0.0
        %363 = vmatpush1.msra.mxu0 0.0
        %364 = vmatprep.subr.mxu0 0.0
        %365 = vmatpush1.msra.mxu0 0.0
        %366 = vmatprep.subr.mxu0 0.0
        %367 = vmatpush1.msra.mxu0 0.0
        %368 = vmatprep.subr.mxu0 0.0
        %369 = vmatpush1.msra.mxu0 0.0
        %370 = vmatprep.subr.mxu0 0.0
        %371 = vmatpush1.msra.mxu0 0.0
        %372 = vmatprep.subr.mxu0 0.0
        %373 = vmatpush1.msra.mxu0 0.0
        %374 = vmatprep.subr.mxu0 0.0
        %375 = vmatpush1.msra.mxu0 0.0
        %376 = vmatprep.subr.mxu0 0.0
        %377 = vmatpush1.msra.mxu0 0.0
        %378 = vmatprep.subr.mxu0 0.0
        %v379 = vand.u32 %v271, 4294901760
        %v380 = vsub.f32 %v271, %v379
        %v381 = vand.u32 %v380, 4294901760
        %v382 = vsub.f32 %v380, %v381
        %v383 = vand.u32 %v382, 4294901760
        %384 = vmatpush1.msra.mxu0 %v383
        %385 = vmatprep.subr.mxu0 0.0
        %v386 = vand.u32 %v258, 4294901760
        %v387 = vsub.f32 %v258, %v386
        %v388 = vand.u32 %v387, 4294901760
        %v389 = vsub.f32 %v387, %v388
        %v390 = vand.u32 %v389, 4294901760
        %391 = vmatpush1.msra.mxu0 %v390
        %392 = vmatprep.subr.mxu0 0.0
        %393 = vmatpush2.msra.mxu0 0.0
        %394 = vmatprep.subr.mxu0 0.0
        %395 = vmatpush2.msra.mxu0 0.0
        %396 = vmatprep.subr.mxu0 0.0
        %397 = vmatpush2.msra.mxu0 0.0
        %398 = vmatprep.subr.mxu0 0.0
        %399 = vmatpush2.msra.mxu0 0.0
        %400 = vmatprep.subr.mxu0 0.0
        %401 = vmatpush2.msra.mxu0 0.0
        %402 = vmatprep.subr.mxu0 0.0
        %403 = vmatpush2.msra.mxu0 0.0
        %404 = vmatprep.subr.mxu0 0.0
        %405 = vmatpush2.msra.mxu0 0.0
        %406 = vmatprep.subr.mxu0 0.0
        %407 = vmatpush2.msra.mxu0 0.0
        %408 = vmatprep.subr.mxu0 0.0
        %409 = vmatpush2.msra.mxu0 0.0
        %410 = vmatprep.subr.mxu0 0.0
        %411 = vmatpush2.msra.mxu0 0.0
        %412 = vmatprep.subr.mxu0 0.0
        %413 = vmatpush2.msra.mxu0 0.0
        %414 = vmatprep.subr.mxu0 0.0
        %415 = vmatpush2.msra.mxu0 0.0
        %416 = vmatprep.subr.mxu0 0.0
        %417 = vmatpush2.msra.mxu0 0.0
        %418 = vmatprep.subr.mxu0 0.0
        %419 = vmatpush2.msra.mxu0 0.0
        %420 = vmatprep.subr.mxu0 0.0
        %421 = vmatpush2.msra.mxu0 0.0
        %422 = vmatprep.subr.mxu0 0.0
        %423 = vmatpush2.msra.mxu0 0.0
        %424 = vmatprep.mubr.f32.mxu0 0.0
        %v425 = vand.u32 %v268, 4294901760
        %426 = vmatmul.mubr.f32.gmra.mxu0 %v425
        %v427 = vpop.f32.mrf.mxu0
        %v428 = vadd.f32 %v347, %v427
        %v429 = vpop.f32.mrf.mxu0
        %430 = vdwg.mxu0
        %431 = vmatprep.subr.mxu0 0.0
        %432 = vmatpush1.msra.mxu0 0.0
        %433 = vmatprep.subr.mxu0 0.0
        %434 = vmatpush1.msra.mxu0 0.0
        %435 = vmatprep.subr.mxu0 0.0
        %436 = vmatpush1.msra.mxu0 0.0
        %437 = vmatprep.subr.mxu0 0.0
        %438 = vmatpush1.msra.mxu0 0.0
        %439 = vmatprep.subr.mxu0 0.0
        %440 = vmatpush1.msra.mxu0 0.0
        %441 = vmatprep.subr.mxu0 0.0
        %442 = vmatpush1.msra.mxu0 0.0
        %443 = vmatprep.subr.mxu0 0.0
        %444 = vmatpush1.msra.mxu0 0.0
        %445 = vmatprep.subr.mxu0 0.0
        %446 = vmatpush1.msra.mxu0 0.0
        %447 = vmatprep.subr.mxu0 0.0
        %448 = vmatpush1.msra.mxu0 0.0
        %449 = vmatprep.subr.mxu0 0.0
        %450 = vmatpush1.msra.mxu0 0.0
        %451 = vmatprep.subr.mxu0 0.0
        %452 = vmatpush1.msra.mxu0 0.0
        %453 = vmatprep.subr.mxu0 0.0
        %454 = vmatpush1.msra.mxu0 0.0
        %455 = vmatprep.subr.mxu0 0.0
        %456 = vmatpush1.msra.mxu0 0.0
        %457 = vmatprep.subr.mxu0 0.0
        %458 = vmatpush1.msra.mxu0 0.0
        %459 = vmatprep.subr.mxu0 0.0
        %v460 = vand.u32 %v271, 4294901760
        %v461 = vsub.f32 %v271, %v460
        %462 = vmatpush1.msra.mxu0 %v461
        %463 = vmatprep.subr.mxu0 0.0
        %v464 = vand.u32 %v258, 4294901760
        %v465 = vsub.f32 %v258, %v464
        %466 = vmatpush1.msra.mxu0 %v465
        %467 = vmatprep.subr.mxu0 0.0
        %468 = vmatpush2.msra.mxu0 0.0
        %469 = vmatprep.subr.mxu0 0.0
        %470 = vmatpush2.msra.mxu0 0.0
        %471 = vmatprep.subr.mxu0 0.0
        %472 = vmatpush2.msra.mxu0 0.0
        %473 = vmatprep.subr.mxu0 0.0
        %474 = vmatpush2.msra.mxu0 0.0
        %475 = vmatprep.subr.mxu0 0.0
        %476 = vmatpush2.msra.mxu0 0.0
        %477 = vmatprep.subr.mxu0 0.0
        %478 = vmatpush2.msra.mxu0 0.0
        %479 = vmatprep.subr.mxu0 0.0
        %480 = vmatpush2.msra.mxu0 0.0
        %481 = vmatprep.subr.mxu0 0.0
        %482 = vmatpush2.msra.mxu0 0.0
        %483 = vmatprep.subr.mxu0 0.0
        %484 = vmatpush2.msra.mxu0 0.0
        %485 = vmatprep.subr.mxu0 0.0
        %486 = vmatpush2.msra.mxu0 0.0
        %487 = vmatprep.subr.mxu0 0.0
        %488 = vmatpush2.msra.mxu0 0.0
        %489 = vmatprep.subr.mxu0 0.0
        %490 = vmatpush2.msra.mxu0 0.0
        %491 = vmatprep.subr.mxu0 0.0
        %492 = vmatpush2.msra.mxu0 0.0
        %493 = vmatprep.subr.mxu0 0.0
        %494 = vmatpush2.msra.mxu0 0.0
        %495 = vmatprep.subr.mxu0 0.0
        %496 = vmatpush2.msra.mxu0 0.0
        %497 = vmatprep.subr.mxu0 0.0
        %498 = vmatpush2.msra.mxu0 0.0
        %499 = vmatprep.mubr.f32.mxu0 0.0
        %v500 = vand.u32 %v268, 4294901760
        %v501 = vsub.f32 %v268, %v500
        %502 = vmatmul.mubr.f32.gmra.mxu0 %v501
        %v503 = vpop.f32.mrf.mxu0
        %v504 = vadd.f32 %v428, %v503
        %v505 = vpop.f32.mrf.mxu0
        %506 = vdwg.mxu0
        %507 = vmatprep.subr.mxu0 0.0
        %508 = vmatpush1.msra.mxu0 0.0
        %509 = vmatprep.subr.mxu0 0.0
        %510 = vmatpush1.msra.mxu0 0.0
        %511 = vmatprep.subr.mxu0 0.0
        %512 = vmatpush1.msra.mxu0 0.0
        %513 = vmatprep.subr.mxu0 0.0
        %514 = vmatpush1.msra.mxu0 0.0
        %515 = vmatprep.subr.mxu0 0.0
        %516 = vmatpush1.msra.mxu0 0.0
        %517 = vmatprep.subr.mxu0 0.0
        %518 = vmatpush1.msra.mxu0 0.0
        %519 = vmatprep.subr.mxu0 0.0
        %520 = vmatpush1.msra.mxu0 0.0
        %521 = vmatprep.subr.mxu0 0.0
        %522 = vmatpush1.msra.mxu0 0.0
        %523 = vmatprep.subr.mxu0 0.0
        %524 = vmatpush1.msra.mxu0 0.0
        %525 = vmatprep.subr.mxu0 0.0
        %526 = vmatpush1.msra.mxu0 0.0
        %527 = vmatprep.subr.mxu0 0.0
        %528 = vmatpush1.msra.mxu0 0.0
        %529 = vmatprep.subr.mxu0 0.0
        %530 = vmatpush1.msra.mxu0 0.0
        %531 = vmatprep.subr.mxu0 0.0
        %532 = vmatpush1.msra.mxu0 0.0
        %533 = vmatprep.subr.mxu0 0.0
        %534 = vmatpush1.msra.mxu0 0.0
        %535 = vmatprep.subr.mxu0 0.0
        %v536 = vand.u32 %v271, 4294901760
        %537 = vmatpush1.msra.mxu0 %v536
        %538 = vmatprep.subr.mxu0 0.0
        %v539 = vand.u32 %v258, 4294901760
        %540 = vmatpush1.msra.mxu0 %v539
        %541 = vmatprep.subr.mxu0 0.0
        %542 = vmatpush2.msra.mxu0 0.0
        %543 = vmatprep.subr.mxu0 0.0
        %544 = vmatpush2.msra.mxu0 0.0
        %545 = vmatprep.subr.mxu0 0.0
        %546 = vmatpush2.msra.mxu0 0.0
        %547 = vmatprep.subr.mxu0 0.0
        %548 = vmatpush2.msra.mxu0 0.0
        %549 = vmatprep.subr.mxu0 0.0
        %550 = vmatpush2.msra.mxu0 0.0
        %551 = vmatprep.subr.mxu0 0.0
        %552 = vmatpush2.msra.mxu0 0.0
        %553 = vmatprep.subr.mxu0 0.0
        %554 = vmatpush2.msra.mxu0 0.0
        %555 = vmatprep.subr.mxu0 0.0
        %556 = vmatpush2.msra.mxu0 0.0
        %557 = vmatprep.subr.mxu0 0.0
        %558 = vmatpush2.msra.mxu0 0.0
        %559 = vmatprep.subr.mxu0 0.0
        %560 = vmatpush2.msra.mxu0 0.0
        %561 = vmatprep.subr.mxu0 0.0
        %562 = vmatpush2.msra.mxu0 0.0
        %563 = vmatprep.subr.mxu0 0.0
        %564 = vmatpush2.msra.mxu0 0.0
        %565 = vmatprep.subr.mxu0 0.0
        %566 = vmatpush2.msra.mxu0 0.0
        %567 = vmatprep.subr.mxu0 0.0
        %568 = vmatpush2.msra.mxu0 0.0
        %569 = vmatprep.subr.mxu0 0.0
        %570 = vmatpush2.msra.mxu0 0.0
        %571 = vmatprep.subr.mxu0 0.0
        %572 = vmatpush2.msra.mxu0 0.0
        %573 = vmatprep.mubr.f32.mxu0 0.0
        %v574 = vand.u32 %v268, 4294901760
        %v575 = vsub.f32 %v268, %v574
        %v576 = vand.u32 %v575, 4294901760
        %577 = vmatmul.mubr.f32.gmra.mxu0 %v576
        %v578 = vpop.f32.mrf.mxu0
        %v579 = vadd.f32 %v504, %v578
        %v580 = vpop.f32.mrf.mxu0
        %581 = vdwg.mxu0
        %582 = vmatprep.subr.mxu0 0.0
        %583 = vmatpush1.msra.mxu0 0.0
        %584 = vmatprep.subr.mxu0 0.0
        %585 = vmatpush1.msra.mxu0 0.0
        %586 = vmatprep.subr.mxu0 0.0
        %587 = vmatpush1.msra.mxu0 0.0
        %588 = vmatprep.subr.mxu0 0.0
        %589 = vmatpush1.msra.mxu0 0.0
        %590 = vmatprep.subr.mxu0 0.0
        %591 = vmatpush1.msra.mxu0 0.0
        %592 = vmatprep.subr.mxu0 0.0
        %593 = vmatpush1.msra.mxu0 0.0
        %594 = vmatprep.subr.mxu0 0.0
        %595 = vmatpush1.msra.mxu0 0.0
        %596 = vmatprep.subr.mxu0 0.0
        %597 = vmatpush1.msra.mxu0 0.0
        %598 = vmatprep.subr.mxu0 0.0
        %599 = vmatpush1.msra.mxu0 0.0
        %600 = vmatprep.subr.mxu0 0.0
        %601 = vmatpush1.msra.mxu0 0.0
        %602 = vmatprep.subr.mxu0 0.0
        %603 = vmatpush1.msra.mxu0 0.0
        %604 = vmatprep.subr.mxu0 0.0
        %605 = vmatpush1.msra.mxu0 0.0
        %606 = vmatprep.subr.mxu0 0.0
        %607 = vmatpush1.msra.mxu0 0.0
        %608 = vmatprep.subr.mxu0 0.0
        %609 = vmatpush1.msra.mxu0 0.0
        %610 = vmatprep.subr.mxu0 0.0
        %v611 = vand.u32 %v271, 4294901760
        %v612 = vsub.f32 %v271, %v611
        %v613 = vand.u32 %v612, 4294901760
        %614 = vmatpush1.msra.mxu0 %v613
        %615 = vmatprep.subr.mxu0 0.0
        %v616 = vand.u32 %v258, 4294901760
        %v617 = vsub.f32 %v258, %v616
        %v618 = vand.u32 %v617, 4294901760
        %619 = vmatpush1.msra.mxu0 %v618
        %620 = vmatprep.subr.mxu0 0.0
        %621 = vmatpush2.msra.mxu0 0.0
        %622 = vmatprep.subr.mxu0 0.0
        %623 = vmatpush2.msra.mxu0 0.0
        %624 = vmatprep.subr.mxu0 0.0
        %625 = vmatpush2.msra.mxu0 0.0
        %626 = vmatprep.subr.mxu0 0.0
        %627 = vmatpush2.msra.mxu0 0.0
        %628 = vmatprep.subr.mxu0 0.0
        %629 = vmatpush2.msra.mxu0 0.0
        %630 = vmatprep.subr.mxu0 0.0
        %631 = vmatpush2.msra.mxu0 0.0
        %632 = vmatprep.subr.mxu0 0.0
        %633 = vmatpush2.msra.mxu0 0.0
        %634 = vmatprep.subr.mxu0 0.0
        %635 = vmatpush2.msra.mxu0 0.0
        %636 = vmatprep.subr.mxu0 0.0
        %637 = vmatpush2.msra.mxu0 0.0
        %638 = vmatprep.subr.mxu0 0.0
        %639 = vmatpush2.msra.mxu0 0.0
        %640 = vmatprep.subr.mxu0 0.0
        %641 = vmatpush2.msra.mxu0 0.0
        %642 = vmatprep.subr.mxu0 0.0
        %643 = vmatpush2.msra.mxu0 0.0
        %644 = vmatprep.subr.mxu0 0.0
        %645 = vmatpush2.msra.mxu0 0.0
        %646 = vmatprep.subr.mxu0 0.0
        %647 = vmatpush2.msra.mxu0 0.0
        %648 = vmatprep.subr.mxu0 0.0
        %649 = vmatpush2.msra.mxu0 0.0
        %650 = vmatprep.subr.mxu0 0.0
        %651 = vmatpush2.msra.mxu0 0.0
        %652 = vmatprep.mubr.f32.mxu0 0.0
        %v653 = vand.u32 %v268, 4294901760
        %654 = vmatmul.mubr.f32.gmra.mxu0 %v653
        %v655 = vpop.f32.mrf.mxu0
        %v656 = vadd.f32 %v579, %v655
        %v657 = vpop.f32.mrf.mxu0
        %658 = vdwg.mxu0
        %659 = vmatprep.subr.mxu0 0.0
        %660 = vmatpush1.msra.mxu0 0.0
        %661 = vmatprep.subr.mxu0 0.0
        %662 = vmatpush1.msra.mxu0 0.0
        %663 = vmatprep.subr.mxu0 0.0
        %664 = vmatpush1.msra.mxu0 0.0
        %665 = vmatprep.subr.mxu0 0.0
        %666 = vmatpush1.msra.mxu0 0.0
        %667 = vmatprep.subr.mxu0 0.0
        %668 = vmatpush1.msra.mxu0 0.0
        %669 = vmatprep.subr.mxu0 0.0
        %670 = vmatpush1.msra.mxu0 0.0
        %671 = vmatprep.subr.mxu0 0.0
        %672 = vmatpush1.msra.mxu0 0.0
        %673 = vmatprep.subr.mxu0 0.0
        %674 = vmatpush1.msra.mxu0 0.0
        %675 = vmatprep.subr.mxu0 0.0
        %676 = vmatpush1.msra.mxu0 0.0
        %677 = vmatprep.subr.mxu0 0.0
        %678 = vmatpush1.msra.mxu0 0.0
        %679 = vmatprep.subr.mxu0 0.0
        %680 = vmatpush1.msra.mxu0 0.0
        %681 = vmatprep.subr.mxu0 0.0
        %682 = vmatpush1.msra.mxu0 0.0
        %683 = vmatprep.subr.mxu0 0.0
        %684 = vmatpush1.msra.mxu0 0.0
        %685 = vmatprep.subr.mxu0 0.0
        %686 = vmatpush1.msra.mxu0 0.0
        %687 = vmatprep.subr.mxu0 0.0
        %v688 = vand.u32 %v271, 4294901760
        %689 = vmatpush1.msra.mxu0 %v688
        %690 = vmatprep.subr.mxu0 0.0
        %v691 = vand.u32 %v258, 4294901760
        %692 = vmatpush1.msra.mxu0 %v691
        %693 = vmatprep.subr.mxu0 0.0
        %694 = vmatpush2.msra.mxu0 0.0
        %695 = vmatprep.subr.mxu0 0.0
        %696 = vmatpush2.msra.mxu0 0.0
        %697 = vmatprep.subr.mxu0 0.0
        %698 = vmatpush2.msra.mxu0 0.0
        %699 = vmatprep.subr.mxu0 0.0
        %700 = vmatpush2.msra.mxu0 0.0
        %701 = vmatprep.subr.mxu0 0.0
        %702 = vmatpush2.msra.mxu0 0.0
        %703 = vmatprep.subr.mxu0 0.0
        %704 = vmatpush2.msra.mxu0 0.0
        %705 = vmatprep.subr.mxu0 0.0
        %706 = vmatpush2.msra.mxu0 0.0
        %707 = vmatprep.subr.mxu0 0.0
        %708 = vmatpush2.msra.mxu0 0.0
        %709 = vmatprep.subr.mxu0 0.0
        %710 = vmatpush2.msra.mxu0 0.0
        %711 = vmatprep.subr.mxu0 0.0
        %712 = vmatpush2.msra.mxu0 0.0
        %713 = vmatprep.subr.mxu0 0.0
        %714 = vmatpush2.msra.mxu0 0.0
        %715 = vmatprep.subr.mxu0 0.0
        %716 = vmatpush2.msra.mxu0 0.0
        %717 = vmatprep.subr.mxu0 0.0
        %718 = vmatpush2.msra.mxu0 0.0
        %719 = vmatprep.subr.mxu0 0.0
        %720 = vmatpush2.msra.mxu0 0.0
        %721 = vmatprep.subr.mxu0 0.0
        %722 = vmatpush2.msra.mxu0 0.0
        %723 = vmatprep.subr.mxu0 0.0
        %724 = vmatpush2.msra.mxu0 0.0
        %725 = vmatprep.mubr.f32.mxu0 0.0
        %v726 = vand.u32 %v268, 4294901760
        %727 = vmatmul.mubr.f32.gmra.mxu0 %v726
        %v728 = vpop.f32.mrf.mxu0
        %v729 = vadd.f32 %v656, %v728
        %v730 = vpop.f32.mrf.mxu0
        %731 = vdwg.mxu0
        %v732 = vmax.f32 %v729, 0.0
        %734 = vrot.lane.b32.xlu0 %v732, 1
        %v735 = vpop.permute.xlu0 %734
        %v737 = vsel %vm246, 0.0, %v735
        %v738 = vmul.f32 %v737, %v237
        %739 = vrot.lane.b32.xlu0 %v732, 127
        %v740 = vpop.permute.xlu0 %739
        %v742 = vsel %vm252, %v740, 0.0
        %v743 = vmul.f32 %v742, %v240
        %v744 = vld [vmem:[%s3] sm:$0xf]
        %v745 = vld [vmem:[%s4] sm:$0xf]
        %747 = vset.pattern.permute.xlu0 0
        %748 = vperm.xlu0 %747, %v745
        %v749 = vpop.permute.xlu0 %748
        %vm751 = vcmask 195584
        %v753 = vsel %vm751, %v744, 0
        %755 = vmatprep.subr.mxu0 0.0
        %756 = vmatpush1.msra.mxu0 0.0
        %757 = vmatprep.subr.mxu0 0.0
        %758 = vmatpush1.msra.mxu0 0.0
        %759 = vmatprep.subr.mxu0 0.0
        %760 = vmatpush1.msra.mxu0 0.0
        %761 = vmatprep.subr.mxu0 0.0
        %762 = vmatpush1.msra.mxu0 0.0
        %763 = vmatprep.subr.mxu0 0.0
        %764 = vmatpush1.msra.mxu0 0.0
        %765 = vmatprep.subr.mxu0 0.0
        %766 = vmatpush1.msra.mxu0 0.0
        %767 = vmatprep.subr.mxu0 0.0
        %768 = vmatpush1.msra.mxu0 0.0
        %769 = vmatprep.subr.mxu0 0.0
        %770 = vmatpush1.msra.mxu0 0.0
        %771 = vmatprep.subr.mxu0 0.0
        %772 = vmatpush1.msra.mxu0 0.0
        %773 = vmatprep.subr.mxu0 0.0
        %774 = vmatpush1.msra.mxu0 0.0
        %775 = vmatprep.subr.mxu0 0.0
        %776 = vmatpush1.msra.mxu0 0.0
        %777 = vmatprep.subr.mxu0 0.0
        %778 = vmatpush1.msra.mxu0 0.0
        %779 = vmatprep.subr.mxu0 0.0
        %780 = vmatpush1.msra.mxu0 0.0
        %781 = vmatprep.subr.mxu0 0.0
        %v782 = vand.u32 %v743, 4294901760
        %783 = vmatpush1.msra.mxu0 %v782
        %784 = vmatprep.subr.mxu0 0.0
        %v785 = vand.u32 %v732, 4294901760
        %786 = vmatpush1.msra.mxu0 %v785
        %787 = vmatprep.subr.mxu0 0.0
        %v788 = vand.u32 %v738, 4294901760
        %789 = vmatpush1.msra.mxu0 %v788
        %790 = vmatprep.subr.mxu0 0.0
        %791 = vmatpush2.msra.mxu0 0.0
        %792 = vmatprep.subr.mxu0 0.0
        %793 = vmatpush2.msra.mxu0 0.0
        %794 = vmatprep.subr.mxu0 0.0
        %795 = vmatpush2.msra.mxu0 0.0
        %796 = vmatprep.subr.mxu0 0.0
        %797 = vmatpush2.msra.mxu0 0.0
        %798 = vmatprep.subr.mxu0 0.0
        %799 = vmatpush2.msra.mxu0 0.0
        %800 = vmatprep.subr.mxu0 0.0
        %801 = vmatpush2.msra.mxu0 0.0
        %802 = vmatprep.subr.mxu0 0.0
        %803 = vmatpush2.msra.mxu0 0.0
        %804 = vmatprep.subr.mxu0 0.0
        %805 = vmatpush2.msra.mxu0 0.0
        %806 = vmatprep.subr.mxu0 0.0
        %807 = vmatpush2.msra.mxu0 0.0
        %808 = vmatprep.subr.mxu0 0.0
        %809 = vmatpush2.msra.mxu0 0.0
        %810 = vmatprep.subr.mxu0 0.0
        %811 = vmatpush2.msra.mxu0 0.0
        %812 = vmatprep.subr.mxu0 0.0
        %813 = vmatpush2.msra.mxu0 0.0
        %814 = vmatprep.subr.mxu0 0.0
        %815 = vmatpush2.msra.mxu0 0.0
        %816 = vmatprep.subr.mxu0 0.0
        %817 = vmatpush2.msra.mxu0 0.0
        %818 = vmatprep.subr.mxu0 0.0
        %819 = vmatpush2.msra.mxu0 0.0
        %820 = vmatprep.subr.mxu0 0.0
        %821 = vmatpush2.msra.mxu0 0.0
        %822 = vmatprep.mubr.f32.mxu0 0.0
        %v823 = vand.u32 %v753, 4294901760
        %v824 = vsub.f32 %v753, %v823
        %v825 = vand.u32 %v824, 4294901760
        %v826 = vsub.f32 %v824, %v825
        %v827 = vand.u32 %v826, 4294901760
        %828 = vmatmul.mubr.f32.gmra.mxu0 %v827
        %v829 = vpop.f32.mrf.mxu0
        %v830 = vadd.f32 %v749, %v829
        %v831 = vpop.f32.mrf.mxu0
        %832 = vdwg.mxu0
        %833 = vmatprep.subr.mxu0 0.0
        %834 = vmatpush1.msra.mxu0 0.0
        %835 = vmatprep.subr.mxu0 0.0
        %836 = vmatpush1.msra.mxu0 0.0
        %837 = vmatprep.subr.mxu0 0.0
        %838 = vmatpush1.msra.mxu0 0.0
        %839 = vmatprep.subr.mxu0 0.0
        %840 = vmatpush1.msra.mxu0 0.0
        %841 = vmatprep.subr.mxu0 0.0
        %842 = vmatpush1.msra.mxu0 0.0
        %843 = vmatprep.subr.mxu0 0.0
        %844 = vmatpush1.msra.mxu0 0.0
        %845 = vmatprep.subr.mxu0 0.0
        %846 = vmatpush1.msra.mxu0 0.0
        %847 = vmatprep.subr.mxu0 0.0
        %848 = vmatpush1.msra.mxu0 0.0
        %849 = vmatprep.subr.mxu0 0.0
        %850 = vmatpush1.msra.mxu0 0.0
        %851 = vmatprep.subr.mxu0 0.0
        %852 = vmatpush1.msra.mxu0 0.0
        %853 = vmatprep.subr.mxu0 0.0
        %854 = vmatpush1.msra.mxu0 0.0
        %855 = vmatprep.subr.mxu0 0.0
        %856 = vmatpush1.msra.mxu0 0.0
        %857 = vmatprep.subr.mxu0 0.0
        %858 = vmatpush1.msra.mxu0 0.0
        %859 = vmatprep.subr.mxu0 0.0
        %v860 = vand.u32 %v743, 4294901760
        %v861 = vsub.f32 %v743, %v860
        %v862 = vand.u32 %v861, 4294901760
        %v863 = vsub.f32 %v861, %v862
        %v864 = vand.u32 %v863, 4294901760
        %865 = vmatpush1.msra.mxu0 %v864
        %866 = vmatprep.subr.mxu0 0.0
        %v867 = vand.u32 %v732, 4294901760
        %v868 = vsub.f32 %v732, %v867
        %v869 = vand.u32 %v868, 4294901760
        %v870 = vsub.f32 %v868, %v869
        %v871 = vand.u32 %v870, 4294901760
        %872 = vmatpush1.msra.mxu0 %v871
        %873 = vmatprep.subr.mxu0 0.0
        %v874 = vand.u32 %v738, 4294901760
        %v875 = vsub.f32 %v738, %v874
        %v876 = vand.u32 %v875, 4294901760
        %v877 = vsub.f32 %v875, %v876
        %v878 = vand.u32 %v877, 4294901760
        %879 = vmatpush1.msra.mxu0 %v878
        %880 = vmatprep.subr.mxu0 0.0
        %881 = vmatpush2.msra.mxu0 0.0
        %882 = vmatprep.subr.mxu0 0.0
        %883 = vmatpush2.msra.mxu0 0.0
        %884 = vmatprep.subr.mxu0 0.0
        %885 = vmatpush2.msra.mxu0 0.0
        %886 = vmatprep.subr.mxu0 0.0
        %887 = vmatpush2.msra.mxu0 0.0
        %888 = vmatprep.subr.mxu0 0.0
        %889 = vmatpush2.msra.mxu0 0.0
        %890 = vmatprep.subr.mxu0 0.0
        %891 = vmatpush2.msra.mxu0 0.0
        %892 = vmatprep.subr.mxu0 0.0
        %893 = vmatpush2.msra.mxu0 0.0
        %894 = vmatprep.subr.mxu0 0.0
        %895 = vmatpush2.msra.mxu0 0.0
        %896 = vmatprep.subr.mxu0 0.0
        %897 = vmatpush2.msra.mxu0 0.0
        %898 = vmatprep.subr.mxu0 0.0
        %899 = vmatpush2.msra.mxu0 0.0
        %900 = vmatprep.subr.mxu0 0.0
        %901 = vmatpush2.msra.mxu0 0.0
        %902 = vmatprep.subr.mxu0 0.0
        %903 = vmatpush2.msra.mxu0 0.0
        %904 = vmatprep.subr.mxu0 0.0
        %905 = vmatpush2.msra.mxu0 0.0
        %906 = vmatprep.subr.mxu0 0.0
        %907 = vmatpush2.msra.mxu0 0.0
        %908 = vmatprep.subr.mxu0 0.0
        %909 = vmatpush2.msra.mxu0 0.0
        %910 = vmatprep.subr.mxu0 0.0
        %911 = vmatpush2.msra.mxu0 0.0
        %912 = vmatprep.mubr.f32.mxu0 0.0
        %v913 = vand.u32 %v753, 4294901760
        %914 = vmatmul.mubr.f32.gmra.mxu0 %v913
        %v915 = vpop.f32.mrf.mxu0
        %v916 = vadd.f32 %v830, %v915
        %v917 = vpop.f32.mrf.mxu0
        %918 = vdwg.mxu0
        %919 = vmatprep.subr.mxu0 0.0
        %920 = vmatpush1.msra.mxu0 0.0
        %921 = vmatprep.subr.mxu0 0.0
        %922 = vmatpush1.msra.mxu0 0.0
        %923 = vmatprep.subr.mxu0 0.0
        %924 = vmatpush1.msra.mxu0 0.0
        %925 = vmatprep.subr.mxu0 0.0
        %926 = vmatpush1.msra.mxu0 0.0
        %927 = vmatprep.subr.mxu0 0.0
        %928 = vmatpush1.msra.mxu0 0.0
        %929 = vmatprep.subr.mxu0 0.0
        %930 = vmatpush1.msra.mxu0 0.0
        %931 = vmatprep.subr.mxu0 0.0
        %932 = vmatpush1.msra.mxu0 0.0
        %933 = vmatprep.subr.mxu0 0.0
        %934 = vmatpush1.msra.mxu0 0.0
        %935 = vmatprep.subr.mxu0 0.0
        %936 = vmatpush1.msra.mxu0 0.0
        %937 = vmatprep.subr.mxu0 0.0
        %938 = vmatpush1.msra.mxu0 0.0
        %939 = vmatprep.subr.mxu0 0.0
        %940 = vmatpush1.msra.mxu0 0.0
        %941 = vmatprep.subr.mxu0 0.0
        %942 = vmatpush1.msra.mxu0 0.0
        %943 = vmatprep.subr.mxu0 0.0
        %944 = vmatpush1.msra.mxu0 0.0
        %945 = vmatprep.subr.mxu0 0.0
        %v946 = vand.u32 %v743, 4294901760
        %v947 = vsub.f32 %v743, %v946
        %948 = vmatpush1.msra.mxu0 %v947
        %949 = vmatprep.subr.mxu0 0.0
        %v950 = vand.u32 %v732, 4294901760
        %v951 = vsub.f32 %v732, %v950
        %952 = vmatpush1.msra.mxu0 %v951
        %953 = vmatprep.subr.mxu0 0.0
        %v954 = vand.u32 %v738, 4294901760
        %v955 = vsub.f32 %v738, %v954
        %956 = vmatpush1.msra.mxu0 %v955
        %957 = vmatprep.subr.mxu0 0.0
        %958 = vmatpush2.msra.mxu0 0.0
        %959 = vmatprep.subr.mxu0 0.0
        %960 = vmatpush2.msra.mxu0 0.0
        %961 = vmatprep.subr.mxu0 0.0
        %962 = vmatpush2.msra.mxu0 0.0
        %963 = vmatprep.subr.mxu0 0.0
        %964 = vmatpush2.msra.mxu0 0.0
        %965 = vmatprep.subr.mxu0 0.0
        %966 = vmatpush2.msra.mxu0 0.0
        %967 = vmatprep.subr.mxu0 0.0
        %968 = vmatpush2.msra.mxu0 0.0
        %969 = vmatprep.subr.mxu0 0.0
        %970 = vmatpush2.msra.mxu0 0.0
        %971 = vmatprep.subr.mxu0 0.0
        %972 = vmatpush2.msra.mxu0 0.0
        %973 = vmatprep.subr.mxu0 0.0
        %974 = vmatpush2.msra.mxu0 0.0
        %975 = vmatprep.subr.mxu0 0.0
        %976 = vmatpush2.msra.mxu0 0.0
        %977 = vmatprep.subr.mxu0 0.0
        %978 = vmatpush2.msra.mxu0 0.0
        %979 = vmatprep.subr.mxu0 0.0
        %980 = vmatpush2.msra.mxu0 0.0
        %981 = vmatprep.subr.mxu0 0.0
        %982 = vmatpush2.msra.mxu0 0.0
        %983 = vmatprep.subr.mxu0 0.0
        %984 = vmatpush2.msra.mxu0 0.0
        %985 = vmatprep.subr.mxu0 0.0
        %986 = vmatpush2.msra.mxu0 0.0
        %987 = vmatprep.subr.mxu0 0.0
        %988 = vmatpush2.msra.mxu0 0.0
        %989 = vmatprep.mubr.f32.mxu0 0.0
        %v990 = vand.u32 %v753, 4294901760
        %v991 = vsub.f32 %v753, %v990
        %992 = vmatmul.mubr.f32.gmra.mxu0 %v991
        %v993 = vpop.f32.mrf.mxu0
        %v994 = vadd.f32 %v916, %v993
        %v995 = vpop.f32.mrf.mxu0
        %996 = vdwg.mxu0
        %997 = vmatprep.subr.mxu0 0.0
        %998 = vmatpush1.msra.mxu0 0.0
        %999 = vmatprep.subr.mxu0 0.0
        %1000 = vmatpush1.msra.mxu0 0.0
        %1001 = vmatprep.subr.mxu0 0.0
        %1002 = vmatpush1.msra.mxu0 0.0
        %1003 = vmatprep.subr.mxu0 0.0
        %1004 = vmatpush1.msra.mxu0 0.0
        %1005 = vmatprep.subr.mxu0 0.0
        %1006 = vmatpush1.msra.mxu0 0.0
        %1007 = vmatprep.subr.mxu0 0.0
        %1008 = vmatpush1.msra.mxu0 0.0
        %1009 = vmatprep.subr.mxu0 0.0
        %1010 = vmatpush1.msra.mxu0 0.0
        %1011 = vmatprep.subr.mxu0 0.0
        %1012 = vmatpush1.msra.mxu0 0.0
        %1013 = vmatprep.subr.mxu0 0.0
        %1014 = vmatpush1.msra.mxu0 0.0
        %1015 = vmatprep.subr.mxu0 0.0
        %1016 = vmatpush1.msra.mxu0 0.0
        %1017 = vmatprep.subr.mxu0 0.0
        %1018 = vmatpush1.msra.mxu0 0.0
        %1019 = vmatprep.subr.mxu0 0.0
        %1020 = vmatpush1.msra.mxu0 0.0
        %1021 = vmatprep.subr.mxu0 0.0
        %1022 = vmatpush1.msra.mxu0 0.0
        %1023 = vmatprep.subr.mxu0 0.0
        %v1024 = vand.u32 %v743, 4294901760
        %1025 = vmatpush1.msra.mxu0 %v1024
        %1026 = vmatprep.subr.mxu0 0.0
        %v1027 = vand.u32 %v732, 4294901760
        %1028 = vmatpush1.msra.mxu0 %v1027
        %1029 = vmatprep.subr.mxu0 0.0
        %v1030 = vand.u32 %v738, 4294901760
        %1031 = vmatpush1.msra.mxu0 %v1030
        %1032 = vmatprep.subr.mxu0 0.0
        %1033 = vmatpush2.msra.mxu0 0.0
        %1034 = vmatprep.subr.mxu0 0.0
        %1035 = vmatpush2.msra.mxu0 0.0
        %1036 = vmatprep.subr.mxu0 0.0
        %1037 = vmatpush2.msra.mxu0 0.0
        %1038 = vmatprep.subr.mxu0 0.0
        %1039 = vmatpush2.msra.mxu0 0.0
        %1040 = vmatprep.subr.mxu0 0.0
        %1041 = vmatpush2.msra.mxu0 0.0
        %1042 = vmatprep.subr.mxu0 0.0
        %1043 = vmatpush2.msra.mxu0 0.0
        %1044 = vmatprep.subr.mxu0 0.0
        %1045 = vmatpush2.msra.mxu0 0.0
        %1046 = vmatprep.subr.mxu0 0.0
        %1047 = vmatpush2.msra.mxu0 0.0
        %1048 = vmatprep.subr.mxu0 0.0
        %1049 = vmatpush2.msra.mxu0 0.0
        %1050 = vmatprep.subr.mxu0 0.0
        %1051 = vmatpush2.msra.mxu0 0.0
        %1052 = vmatprep.subr.mxu0 0.0
        %1053 = vmatpush2.msra.mxu0 0.0
        %1054 = vmatprep.subr.mxu0 0.0
        %1055 = vmatpush2.msra.mxu0 0.0
        %1056 = vmatprep.subr.mxu0 0.0
        %1057 = vmatpush2.msra.mxu0 0.0
        %1058 = vmatprep.subr.mxu0 0.0
        %1059 = vmatpush2.msra.mxu0 0.0
        %1060 = vmatprep.subr.mxu0 0.0
        %1061 = vmatpush2.msra.mxu0 0.0
        %1062 = vmatprep.subr.mxu0 0.0
        %1063 = vmatpush2.msra.mxu0 0.0
        %1064 = vmatprep.mubr.f32.mxu0 0.0
        %v1065 = vand.u32 %v753, 4294901760
        %v1066 = vsub.f32 %v753, %v1065
        %v1067 = vand.u32 %v1066, 4294901760
        %1068 = vmatmul.mubr.f32.gmra.mxu0 %v1067
        %v1069 = vpop.f32.mrf.mxu0
        %v1070 = vadd.f32 %v994, %v1069
        %v1071 = vpop.f32.mrf.mxu0
        %1072 = vdwg.mxu0
        %1073 = vmatprep.subr.mxu0 0.0
        %1074 = vmatpush1.msra.mxu0 0.0
        %1075 = vmatprep.subr.mxu0 0.0
        %1076 = vmatpush1.msra.mxu0 0.0
        %1077 = vmatprep.subr.mxu0 0.0
        %1078 = vmatpush1.msra.mxu0 0.0
        %1079 = vmatprep.subr.mxu0 0.0
        %1080 = vmatpush1.msra.mxu0 0.0
        %1081 = vmatprep.subr.mxu0 0.0
        %1082 = vmatpush1.msra.mxu0 0.0
        %1083 = vmatprep.subr.mxu0 0.0
        %1084 = vmatpush1.msra.mxu0 0.0
        %1085 = vmatprep.subr.mxu0 0.0
        %1086 = vmatpush1.msra.mxu0 0.0
        %1087 = vmatprep.subr.mxu0 0.0
        %1088 = vmatpush1.msra.mxu0 0.0
        %1089 = vmatprep.subr.mxu0 0.0
        %1090 = vmatpush1.msra.mxu0 0.0
        %1091 = vmatprep.subr.mxu0 0.0
        %1092 = vmatpush1.msra.mxu0 0.0
        %1093 = vmatprep.subr.mxu0 0.0
        %1094 = vmatpush1.msra.mxu0 0.0
        %1095 = vmatprep.subr.mxu0 0.0
        %1096 = vmatpush1.msra.mxu0 0.0
        %1097 = vmatprep.subr.mxu0 0.0
        %1098 = vmatpush1.msra.mxu0 0.0
        %1099 = vmatprep.subr.mxu0 0.0
        %v1100 = vand.u32 %v743, 4294901760
        %v1101 = vsub.f32 %v743, %v1100
        %v1102 = vand.u32 %v1101, 4294901760
        %1103 = vmatpush1.msra.mxu0 %v1102
        %1104 = vmatprep.subr.mxu0 0.0
        %v1105 = vand.u32 %v732, 4294901760
        %v1106 = vsub.f32 %v732, %v1105
        %v1107 = vand.u32 %v1106, 4294901760
        %1108 = vmatpush1.msra.mxu0 %v1107
        %1109 = vmatprep.subr.mxu0 0.0
        %v1110 = vand.u32 %v738, 4294901760
        %v1111 = vsub.f32 %v738, %v1110
        %v1112 = vand.u32 %v1111, 4294901760
        %1113 = vmatpush1.msra.mxu0 %v1112
        %1114 = vmatprep.subr.mxu0 0.0
        %1115 = vmatpush2.msra.mxu0 0.0
        %1116 = vmatprep.subr.mxu0 0.0
        %1117 = vmatpush2.msra.mxu0 0.0
        %1118 = vmatprep.subr.mxu0 0.0
        %1119 = vmatpush2.msra.mxu0 0.0
        %1120 = vmatprep.subr.mxu0 0.0
        %1121 = vmatpush2.msra.mxu0 0.0
        %1122 = vmatprep.subr.mxu0 0.0
        %1123 = vmatpush2.msra.mxu0 0.0
        %1124 = vmatprep.subr.mxu0 0.0
        %1125 = vmatpush2.msra.mxu0 0.0
        %1126 = vmatprep.subr.mxu0 0.0
        %1127 = vmatpush2.msra.mxu0 0.0
        %1128 = vmatprep.subr.mxu0 0.0
        %1129 = vmatpush2.msra.mxu0 0.0
        %1130 = vmatprep.subr.mxu0 0.0
        %1131 = vmatpush2.msra.mxu0 0.0
        %1132 = vmatprep.subr.mxu0 0.0
        %1133 = vmatpush2.msra.mxu0 0.0
        %1134 = vmatprep.subr.mxu0 0.0
        %1135 = vmatpush2.msra.mxu0 0.0
        %1136 = vmatprep.subr.mxu0 0.0
        %1137 = vmatpush2.msra.mxu0 0.0
        %1138 = vmatprep.subr.mxu0 0.0
        %1139 = vmatpush2.msra.mxu0 0.0
        %1140 = vmatprep.subr.mxu0 0.0
        %1141 = vmatpush2.msra.mxu0 0.0
        %1142 = vmatprep.subr.mxu0 0.0
        %1143 = vmatpush2.msra.mxu0 0.0
        %1144 = vmatprep.subr.mxu0 0.0
        %1145 = vmatpush2.msra.mxu0 0.0
        %1146 = vmatprep.mubr.f32.mxu0 0.0
        %v1147 = vand.u32 %v753, 4294901760
        %1148 = vmatmul.mubr.f32.gmra.mxu0 %v1147
        %v1149 = vpop.f32.mrf.mxu0
        %v1150 = vadd.f32 %v1070, %v1149
        %v1151 = vpop.f32.mrf.mxu0
        %1152 = vdwg.mxu0
        %1153 = vmatprep.subr.mxu0 0.0
        %1154 = vmatpush1.msra.mxu0 0.0
        %1155 = vmatprep.subr.mxu0 0.0
        %1156 = vmatpush1.msra.mxu0 0.0
        %1157 = vmatprep.subr.mxu0 0.0
        %1158 = vmatpush1.msra.mxu0 0.0
        %1159 = vmatprep.subr.mxu0 0.0
        %1160 = vmatpush1.msra.mxu0 0.0
        %1161 = vmatprep.subr.mxu0 0.0
        %1162 = vmatpush1.msra.mxu0 0.0
        %1163 = vmatprep.subr.mxu0 0.0
        %1164 = vmatpush1.msra.mxu0 0.0
        %1165 = vmatprep.subr.mxu0 0.0
        %1166 = vmatpush1.msra.mxu0 0.0
        %1167 = vmatprep.subr.mxu0 0.0
        %1168 = vmatpush1.msra.mxu0 0.0
        %1169 = vmatprep.subr.mxu0 0.0
        %1170 = vmatpush1.msra.mxu0 0.0
        %1171 = vmatprep.subr.mxu0 0.0
        %1172 = vmatpush1.msra.mxu0 0.0
        %1173 = vmatprep.subr.mxu0 0.0
        %1174 = vmatpush1.msra.mxu0 0.0
        %1175 = vmatprep.subr.mxu0 0.0
        %1176 = vmatpush1.msra.mxu0 0.0
        %1177 = vmatprep.subr.mxu0 0.0
        %1178 = vmatpush1.msra.mxu0 0.0
        %1179 = vmatprep.subr.mxu0 0.0
        %v1180 = vand.u32 %v743, 4294901760
        %1181 = vmatpush1.msra.mxu0 %v1180
        %1182 = vmatprep.subr.mxu0 0.0
        %v1183 = vand.u32 %v732, 4294901760
        %1184 = vmatpush1.msra.mxu0 %v1183
        %1185 = vmatprep.subr.mxu0 0.0
        %v1186 = vand.u32 %v738, 4294901760
        %1187 = vmatpush1.msra.mxu0 %v1186
        %1188 = vmatprep.subr.mxu0 0.0
        %1189 = vmatpush2.msra.mxu0 0.0
        %1190 = vmatprep.subr.mxu0 0.0
        %1191 = vmatpush2.msra.mxu0 0.0
        %1192 = vmatprep.subr.mxu0 0.0
        %1193 = vmatpush2.msra.mxu0 0.0
        %1194 = vmatprep.subr.mxu0 0.0
        %1195 = vmatpush2.msra.mxu0 0.0
        %1196 = vmatprep.subr.mxu0 0.0
        %1197 = vmatpush2.msra.mxu0 0.0
        %1198 = vmatprep.subr.mxu0 0.0
        %1199 = vmatpush2.msra.mxu0 0.0
        %1200 = vmatprep.subr.mxu0 0.0
        %1201 = vmatpush2.msra.mxu0 0.0
        %1202 = vmatprep.subr.mxu0 0.0
        %1203 = vmatpush2.msra.mxu0 0.0
        %1204 = vmatprep.subr.mxu0 0.0
        %1205 = vmatpush2.msra.mxu0 0.0
        %1206 = vmatprep.subr.mxu0 0.0
        %1207 = vmatpush2.msra.mxu0 0.0
        %1208 = vmatprep.subr.mxu0 0.0
        %1209 = vmatpush2.msra.mxu0 0.0
        %1210 = vmatprep.subr.mxu0 0.0
        %1211 = vmatpush2.msra.mxu0 0.0
        %1212 = vmatprep.subr.mxu0 0.0
        %1213 = vmatpush2.msra.mxu0 0.0
        %1214 = vmatprep.subr.mxu0 0.0
        %1215 = vmatpush2.msra.mxu0 0.0
        %1216 = vmatprep.subr.mxu0 0.0
        %1217 = vmatpush2.msra.mxu0 0.0
        %1218 = vmatprep.subr.mxu0 0.0
        %1219 = vmatpush2.msra.mxu0 0.0
        %1220 = vmatprep.mubr.f32.mxu0 0.0
        %v1221 = vand.u32 %v753, 4294901760
        %1222 = vmatmul.mubr.f32.gmra.mxu0 %v1221
        %v1223 = vpop.f32.mrf.mxu0
        %v1224 = vadd.f32 %v1150, %v1223
        %v1225 = vpop.f32.mrf.mxu0
        %1226 = vdwg.mxu0
        %v1227 = vmax.f32 %v1224, 0.0
        %vm1228 = vcmask 125952
        %1229 = vst.msk [vmem:[%s228] sm:$0xf] %vm1228, %v1227
        %s1230 = sand.u32 %s138, 1
        %s1231 = scalar_lea.sflag [#allocation4], %s1230
        %s1232 = sand.u32 %s138, 1
        %s1233 = smul.addr %s1232, 4
        %s1234 = scalar_lea.vmem [#allocation5], %s1233
        // Predicated region
        $region45: #{tpu_custom_call.1} parent=39 // pred_check
          %p1235 = pneg %p148
        $region46: #{tpu_custom_call.1} parent=39 // pred_check_branch
          %1237 = sbr.rel (%p1235) target = $region48
        $region47: #{tpu_custom_call.1} parent=39 // pred_region
          %s1239 = ssub.s32 64, 64
          %1240 = vsyncadd %s1231, %s1239
          %s1241 = smul.addr %s20, 64
          %s1242 = scalar_lea.hbm %s5, %s1241
          %s1244 = sshll.u32 %s1234, 4
          %s1245 = int_to_ptr.vmem [resolvable:$true] %s1244
          %1247 = dma.vmem_to_hbm [thread:$0]  %s1245, 64, %s1242, %s1231
        $region48: #{tpu_custom_call.1} parent=39 // pred_fallthru
          _
      $region40: #{tpu_custom_call.1} parent=5 // pred_fallthru
        _
      %p1248 = scmp.le.s32.totalorder 2, %s15
      // Predicated region
      $region49: #{tpu_custom_call.1} parent=5 // pred_check
        %p1249 = pneg %p1248
      $region50: #{tpu_custom_call.1} parent=5 // pred_check_branch
        %1251 = sbr.rel (%p1249) target = $region52
      $region51: #{tpu_custom_call.1} parent=5 // pred_region
        %s1252 = ssub.s32 %s15, 2
        // Predicated region
        $region53: #{tpu_custom_call.1} parent=51 // pred_check
          %p1253 = pneg %p154
        $region54: #{tpu_custom_call.1} parent=51 // pred_check_branch
          %1255 = sbr.rel (%p1253) target = $region56
        $region55: #{tpu_custom_call.1} parent=51 // pred_region
          %s1256 = sand.u32 %s139, 1
          %s1257 = scalar_lea.sflag [#allocation4], %s1256
          %s1258 = sand.u32 %s139, 1
          %s1259 = smul.addr %s1258, 4
          %s1260 = scalar_lea.vmem [#allocation5], %s1259
          %1261 = dma.done %s1257, 64
        $region56: #{tpu_custom_call.1} parent=51 // pred_fallthru
          _
      $region52: #{tpu_custom_call.1} parent=5 // pred_fallthru
        _
    $region6: #{tpu_custom_call.1} parent=1 // loop_footer
      %s19 = sadd.s32 1, %s15
    $region7: #{tpu_custom_call.1} parent=1 // loop_footer_branch
      %14 = sbr.rel target = $region3
    $region8: #{tpu_custom_call.1} parent=1 // loop_exit
      _
    %1262 = vsyncpa [#allocation3], 1
    %s1263 = scalar_lea.sflag [#allocation3], 1
    %1264 = vsyncpa %s1263, 1
    %1265 = vsyncpa [#allocation4], 1
    %s1266 = scalar_lea.sflag [#allocation4], 1
    %1267 = vsyncpa %s1266, 1

</llo_original>
